<compile_context>
chip_gen: v7x
topology: tpu7x:2x2x1
jax: 0.10.0
libtpu: 0.0.40
codegen_flags: <defaults>
</compile_context>

<pallas_src>
import functools

import jax
import jax.numpy as jnp
from jax.experimental import pallas as pl
from jax.experimental.pallas import tpu as pltpu


def _round_up(x, m):
    return (x + m - 1) // m * m


# --------------------------- fused whole-image path ---------------------------

def _ca_fused_kernel(x_ref, w_ref, b_ref, o_ref):
    """Fused CALayer for a (Bt, C, HW) block, all f32.

    x_ref: (Bt, C, HW)   image block (channels on sublanes, pixels on lanes)
    w_ref: (C_in, C_out) shift-masked 1x1 weight, transposed, pre-scaled by 1/HW
    b_ref: (1, C_out)    1x1 conv bias
    o_ref: (Bt, C, HW)
    """
    x = x_ref[...]                                   # (Bt, C, HW)
    pooled = jnp.sum(x, axis=-1)                     # (Bt, C)  f32 lane reduce (XLU)
    gate = jax.nn.sigmoid(
        jnp.dot(pooled, w_ref[...], preferred_element_type=jnp.float32)
        + b_ref[...])                                # (Bt, C)  tiny f32 matmul
    o_ref[...] = x * gate[:, :, None]                # channel-wise rescale


def _ca_fused(x_flat, w_k, b_row, bt, vmem_limit):
    n, c, hw = x_flat.shape
    return pl.pallas_call(
        _ca_fused_kernel,
        out_shape=jax.ShapeDtypeStruct((n, c, hw), jnp.float32),
        grid=(n // bt,),
        in_specs=[
            pl.BlockSpec((bt, c, hw), lambda i: (i, 0, 0)),
            pl.BlockSpec((c, c), lambda i: (0, 0)),
            pl.BlockSpec((1, c), lambda i: (0, 0)),
        ],
        out_specs=pl.BlockSpec((bt, c, hw), lambda i: (i, 0, 0)),
        compiler_params=pltpu.CompilerParams(
            dimension_semantics=("parallel",),
            vmem_limit_bytes=vmem_limit),
    )(x_flat, w_k, b_row)


# --------------------- HW-tiled two-pass fallback (large images) ---------------------

def _pool_sum_kernel(x_ref, s_ref):
    """Accumulate per-channel sums over the HW grid axis into a (1, C, 1) block."""
    @pl.when(pl.program_id(1) == 0)
    def _():
        s_ref[...] = jnp.zeros_like(s_ref)
    s_ref[...] += jnp.sum(x_ref[...], axis=-1, keepdims=True)


def _rescale_kernel(x_ref, g_ref, o_ref):
    o_ref[...] = x_ref[...] * g_ref[...]


def _ca_tiled(x_flat, w_k, bias, hw_tile, vmem_limit):
    n, c, hw_pad = x_flat.shape
    n_hw = hw_pad // hw_tile

    # Pass 1: pooled channel sums, HW axis is a reduction ("arbitrary").
    pooled = pl.pallas_call(
        _pool_sum_kernel,
        out_shape=jax.ShapeDtypeStruct((n, c, 1), jnp.float32),
        grid=(n, n_hw),
        in_specs=[pl.BlockSpec((1, c, hw_tile), lambda i, j: (i, 0, j))],
        out_specs=pl.BlockSpec((1, c, 1), lambda i, j: (i, 0, 0)),
        compiler_params=pltpu.CompilerParams(
            dimension_semantics=("parallel", "arbitrary"),
            vmem_limit_bytes=vmem_limit),
    )(x_flat)

    # Tiny (N, C) gate math stays in plain XLA (negligible).
    gate = jax.nn.sigmoid(pooled[:, :, 0] @ w_k + bias[None, :])
    gate = gate.reshape(n, c, 1).astype(jnp.float32)

    # Pass 2: channel-wise rescale, fully parallel.
    return pl.pallas_call(
        _rescale_kernel,
        out_shape=jax.ShapeDtypeStruct((n, c, hw_pad), jnp.float32),
        grid=(n, n_hw),
        in_specs=[pl.BlockSpec((1, c, hw_tile), lambda i, j: (i, 0, j)),
                  pl.BlockSpec((1, c, 1), lambda i, j: (i, 0, 0))],
        out_specs=pl.BlockSpec((1, c, hw_tile), lambda i, j: (i, 0, j)),
        compiler_params=pltpu.CompilerParams(
            dimension_semantics=("parallel", "parallel"),
            vmem_limit_bytes=vmem_limit),
    )(x_flat, gate)


# ----------------------------------- wrapper -----------------------------------

def ca_layer(x_nchw, w1x1, bias, *, n_div=5,
             fused_block_limit_bytes=12 << 20,   # per-image fused block budget (v7x-safe)
             hw_tile_bytes=2 << 20):             # HW tile budget for the tiled fallback
    """CALayer forward.

    x_nchw: (N, C, H, W) f32
    w1x1:   (C, C) f32  -- PyTorch Conv2d(C, C, 1) weight, squeezed
    bias:   (C,)   f32
    """
    n, c, h, w = x_nchw.shape
    assert w1x1.shape == (c, c) and bias.shape == (c,)
    g = c // n_div
    assert c - 4 * g > 0, "center-tap group must be non-empty"
    hw = h * w

    # Host-side weight prep: zero the columns of the channel groups that only see
    # zero padding after the shift conv on the 1x1 pooled map, transpose, and fold
    # in 1/(H*W) so the kernel only needs a SUM over pixels.
    col_mask = (jnp.arange(c) >= 4 * g).astype(jnp.float32)
    w_k = ((w1x1.astype(jnp.float32) * col_mask[None, :]).T / float(hw))   # (C_in, C_out)
    b_row = bias.reshape(1, c).astype(jnp.float32)

    hw128 = _round_up(hw, 128)
    per_image_bytes = c * hw128 * 4

    if per_image_bytes <= fused_block_limit_bytes:
        # ---------------- fused single-pass path ----------------
        # Batch images per grid step (target ~4 MiB blocks), but keep >= 2 grid
        # steps when possible so the parallel axis can split across TensorCores.
        bt = max(1, min(n, (4 << 20) // per_image_bytes))
        if n >= 2:
            bt = max(1, min(bt, n // 2))
        while n % bt:
            bt -= 1

        x_flat = x_nchw.reshape(n, c, hw)
        if hw128 != hw:
            x_flat = jnp.pad(x_flat, ((0, 0), (0, 0), (0, hw128 - hw)))

        block_bytes = bt * c * hw128 * 4
        vmem_limit = int(min(max(32 << 20, 4 * block_bytes + (2 << 20)), 56 << 20))
        out = _ca_fused(x_flat, w_k, b_row, bt, vmem_limit)
        return out[:, :, :hw].reshape(n, c, h, w)

    # ---------------- HW-tiled two-pass fallback ----------------
    hw_tile = min(hw128, max(128, (hw_tile_bytes // (c * 4)) // 128 * 128))
    hw_pad = _round_up(hw, hw_tile)
    x_flat = x_nchw.reshape(n, c, hw)
    if hw_pad != hw:
        x_flat = jnp.pad(x_flat, ((0, 0), (0, 0), (0, hw_pad - hw)))

    tile_bytes = c * hw_tile * 4
    vmem_limit = int(min(max(32 << 20, 8 * tile_bytes + (2 << 20)), 56 << 20))
    out = _ca_tiled(x_flat, w_k, bias.astype(jnp.float32), hw_tile, vmem_limit)
    return out[:, :, :hw].reshape(n, c, h, w)


def ca_layer_reference(x, w1x1, bias, *, n_div=5):
    """Pure-JAX reference mirroring the PyTorch graph step by step."""
    _, c, _, _ = x.shape
    g = c // n_div
    y = jnp.mean(x, axis=(2, 3))                      # AdaptiveAvgPool2d(1)
    y = y.at[:, :4 * g].set(0.0)                      # shifted groups read zero padding
    s = jax.nn.sigmoid(y @ w1x1.T + bias)             # 1x1 conv + sigmoid
    return x * s[:, :, None, None]


if __name__ == "__main__":
    key = jax.random.PRNGKey(0)
    kx, kw, kb = jax.random.split(key, 3)

    # CALayer default channel=32; small spatial size, batch=2.
    N, C, H, W = 2, 32, 16, 16
    x = jax.random.normal(kx, (N, C, H, W), jnp.float32)
    w1x1 = 0.1 * jax.random.normal(kw, (C, C), jnp.float32)
    bias = 0.01 * jax.random.normal(kb, (C,), jnp.float32)

    ref = ca_layer_reference(x, w1x1, bias)

    # Fused single-pass path (default for these sizes).
    fused_fn = jax.jit(ca_layer)
    out = jax.block_until_ready(fused_fn(x, w1x1, bias))
    assert out.shape == (N, C, H, W), out.shape
    assert out.dtype == jnp.float32
    err = float(jnp.max(jnp.abs(out - ref)))
    assert err < 1e-4, f"fused path: max abs error vs reference: {err}"

    # HW-tiled two-pass fallback, forced so the large-image path is exercised
    # (hw_tile_bytes=1 -> 128-lane tiles -> 2 HW tiles for this input).
    tiled_fn = jax.jit(functools.partial(
        ca_layer, fused_block_limit_bytes=0, hw_tile_bytes=1))
    out_t = jax.block_until_ready(tiled_fn(x, w1x1, bias))
    err_t = float(jnp.max(jnp.abs(out_t - ref)))
    assert err_t < 1e-4, f"tiled path: max abs error vs reference: {err_t}"

    print("KERNEL_OK")
</pallas_src>

<mosaic_0001>
module attributes {stable_mosaic.version = 11 : i64} {
  func.func @_ca_fused_kernel(%arg0: i32, %arg1: memref<1x32x256xf32, #tpu.memory_space<vmem>>, %arg2: memref<32x32xf32, #tpu.memory_space<vmem>>, %arg3: memref<1x32xf32, #tpu.memory_space<vmem>>, %arg4: memref<1x32x256xf32, #tpu.memory_space<vmem>>) attributes {dimension_semantics = [#tpu.dimension_semantics<parallel>], iteration_bounds = array<i64: 2>, scalar_prefetch = 0 : i64, scratch_operands = 0 : i64, tpu.core_type = #tpu.core_type<tc>, window_params = [{transform_indices = @transform_0, window_bounds = array<i64: 1, 32, 256>}, {pipeline_mode = #tpu.pipeline_mode<synchronous>, transform_indices = @transform_1, window_bounds = array<i64: 32, 32>}, {pipeline_mode = #tpu.pipeline_mode<synchronous>, transform_indices = @transform_2, window_bounds = array<i64: 1, 32>}, {transform_indices = @transform_3, window_bounds = array<i64: 1, 32, 256>}]} {
    %c0 = arith.constant 0 : index
    %c0_0 = arith.constant 0 : index
    %c0_1 = arith.constant 0 : index
    %0 = vector.load %arg1[%c0, %c0_0, %c0_1] : memref<1x32x256xf32, #tpu.memory_space<vmem>>, vector<1x32x256xf32>
    %cst = arith.constant dense<0.000000e+00> : vector<1x32xf32>
    %1 = vector.multi_reduction <add>, %0, %cst [2] : vector<1x32x256xf32> to vector<1x32xf32>
    %c0_2 = arith.constant 0 : index
    %c0_3 = arith.constant 0 : index
    %2 = vector.load %arg2[%c0_2, %c0_3] : memref<32x32xf32, #tpu.memory_space<vmem>>, vector<32x32xf32>
    %cst_4 = arith.constant dense<0.000000e+00> : vector<1x32xf32>
    %3 = tpu.matmul %1, %2, %cst_4 {dimension_numbers = #tpu.dot_dimension_numbers<[1], [0], [0], [1], [0, 0, 1, 1], [], []>} : vector<1x32xf32>, vector<32x32xf32>, vector<1x32xf32> -> vector<1x32xf32>
    %c0_5 = arith.constant 0 : index
    %c0_6 = arith.constant 0 : index
    %4 = vector.load %arg3[%c0_5, %c0_6] : memref<1x32xf32, #tpu.memory_space<vmem>>, vector<1x32xf32>
    %5 = arith.addf %3, %4 : vector<1x32xf32>
    %6 = arith.negf %5 : vector<1x32xf32>
    %7 = math.exp %6 : vector<1x32xf32>
    %cst_7 = arith.constant 1.000000e+00 : f32
    %8 = vector.broadcast %cst_7 : f32 to vector<1x32xf32>
    %9 = arith.addf %8, %7 : vector<1x32xf32>
    %10 = arith.divf %8, %9 : vector<1x32xf32>
    %11 = vector.shape_cast %10 : vector<1x32xf32> to vector<1x32x1xf32>
    %12 = vector.broadcast %11 : vector<1x32x1xf32> to vector<1x32x256xf32>
    %13 = arith.mulf %0, %12 : vector<1x32x256xf32>
    %c0_8 = arith.constant 0 : index
    %c0_9 = arith.constant 0 : index
    %c0_10 = arith.constant 0 : index
    %14 = vector.load %arg4[%c0_8, %c0_9, %c0_10] : memref<1x32x256xf32, #tpu.memory_space<vmem>>, vector<1x32x256xf32>
    tpu.vector_store %arg4[%c0_8, %c0_9, %c0_10], %13 {strides = array<i32>} : memref<1x32x256xf32, #tpu.memory_space<vmem>>, vector<1x32x256xf32>,
    return
  }
  func.func @transform_0(%arg0: i32) -> (i32, i32, i32) {
    %c0_i32 = arith.constant 0 : i32
    %c0_i32_0 = arith.constant 0 : i32
    %c0_i32_1 = arith.constant 0 : i32
    return %arg0, %c0_i32, %c0_i32_0 : i32, i32, i32
  }
  func.func @transform_1(%arg0: i32) -> (i32, i32) {
    %c0_i32 = arith.constant 0 : i32
    %c0_i32_0 = arith.constant 0 : i32
    %c0_i32_1 = arith.constant 0 : i32
    return %c0_i32, %c0_i32_0 : i32, i32
  }
  func.func @transform_2(%arg0: i32) -> (i32, i32) {
    %c0_i32 = arith.constant 0 : i32
    %c0_i32_0 = arith.constant 0 : i32
    %c0_i32_1 = arith.constant 0 : i32
    return %c0_i32, %c0_i32_0 : i32, i32
  }
  func.func @transform_3(%arg0: i32) -> (i32, i32, i32) {
    %c0_i32 = arith.constant 0 : i32
    %c0_i32_0 = arith.constant 0 : i32
    %c0_i32_1 = arith.constant 0 : i32
    return %arg0, %c0_i32, %c0_i32_0 : i32, i32, i32
  }
}

</mosaic_0001>

<llo_original>
// kernel: ca_layer.1
$region0: #{ca_layer.1}
  #allocation0 [shape = 'u32[]', space=smem, size = 0x4, offset = 0x4, fixed_abs, tag = 'smem constant byte address 0x4 - core index']
  #allocation1 [shape = 'u32[144,128]{1,0:T(1,128)}', space=vmem, size = 0x12000, scoped, tag = 'internal scratch']
  %s0 = inlined_call_operand.vmem [shape: f32[2,32,256], index: 0, kind: input, shape index: {}]
  %s1 = inlined_call_operand.vmem [shape: f32[32,32], index: 1, kind: input, shape index: {}]
  %s2 = inlined_call_operand.vmem [shape: f32[1,32], index: 2, kind: input, shape index: {}]
  %s3 = inlined_call_operand.vmem [shape: f32[2,32,256], index: 3, kind: output, shape index: {}]
  %s4 = sld [smem:[#allocation0]]
  $region45: #{ca_layer.1} parent=0
    _
  %s6 = ssub.s32 1, %s4
  %s7 = scalar_select 0, %s6, %s4
  loop: start=0, step=1, limit=4
  $region2: #{ca_layer.1} parent=0 // loop_pre_header
    _
  $region3: #{ca_layer.1} parent=0 // loop_header
    %s9 = sphi 0, %s13
    %p10 = scmp.ge.s32.totalorder %s9, 4
    %s19 = sphi 0, %s21
    %s22 = sphi 0, %s19
    %s23 = sphi 0, %s22
    %s39 = sphi 0, %s23
    %s43 = sphi 0, %s43
    %s45 = sphi 0, %s43
    %s46 = sphi 0, %s45
    %s60 = sphi 0, %s46
    %s64 = sphi 0, %s64
    %s66 = sphi 0, %s64
    %s67 = sphi 0, %s66
    %s81 = sphi 0, %s67
    %s87 = sphi 0, %s89
    %s90 = sphi 0, %s87
    %s91 = sphi 0, %s90
    %s107 = sphi 0, %s91
  $region4: #{ca_layer.1} parent=0 // loop_header_branch
    %12 = sbr.rel (%p10) target = $region8
  $region5: #{ca_layer.1} parent=0 // loop_body
    %s14 = ssub.s32 %s9, 1
    %s15 = ssub.s32 %s9, 2
    %s16 = sadd.s32 %s9, 1
    %s17 = ssub.s32 %s9, %s16
    %p18 = scmp.eq.s32.totalorder %s17, 0
    %s20 = sadd.s32 %s19, 1
    %s21 = scalar_select %p18, %s19, %s20
    %p24 = pneg %p18
    %p25 = scmp.eq.s32.totalorder %s9, 1
    %p26 = por %p24, %p25
    %p27 = scmp.ne.s32.totalorder %s19, %s22
    %p28 = scmp.eq.s32.totalorder %s9, 0
    %p29 = por %p27, %p28
    %p30 = scmp.ne.s32.totalorder %s19, %s22
    %p31 = scmp.eq.s32.totalorder %s14, 1
    %p32 = por %p30, %p31
    %p33 = scmp.ne.s32.totalorder %s22, %s23
    %p34 = scmp.eq.s32.totalorder %s14, 0
    %p35 = por %p33, %p34
    %p36 = scmp.ne.s32.totalorder %s22, %s23
    %p37 = scmp.eq.s32.totalorder %s15, 1
    %p38 = por %p36, %p37
    %p40 = scmp.ne.s32.totalorder %s23, %s39
    %p41 = scmp.eq.s32.totalorder %s15, 0
    %p42 = por %p40, %p41
    %s44 = sadd.s32 %s43, 1
    %p47 = scmp.eq.s32.totalorder %s9, 1
    %p48 = scmp.ne.s32.totalorder %s43, %s45
    %p49 = scmp.eq.s32.totalorder %s9, 0
    %p50 = por %p48, %p49
    %p51 = scmp.ne.s32.totalorder %s43, %s45
    %p52 = scmp.eq.s32.totalorder %s14, 1
    %p53 = por %p51, %p52
    %p54 = scmp.ne.s32.totalorder %s45, %s46
    %p55 = scmp.eq.s32.totalorder %s14, 0
    %p56 = por %p54, %p55
    %p57 = scmp.ne.s32.totalorder %s45, %s46
    %p58 = scmp.eq.s32.totalorder %s15, 1
    %p59 = por %p57, %p58
    %p61 = scmp.ne.s32.totalorder %s46, %s60
    %p62 = scmp.eq.s32.totalorder %s15, 0
    %p63 = por %p61, %p62
    %s65 = sadd.s32 %s64, 1
    %p68 = scmp.eq.s32.totalorder %s9, 1
    %p69 = scmp.ne.s32.totalorder %s64, %s66
    %p70 = scmp.eq.s32.totalorder %s9, 0
    %p71 = por %p69, %p70
    %p72 = scmp.ne.s32.totalorder %s64, %s66
    %p73 = scmp.eq.s32.totalorder %s14, 1
    %p74 = por %p72, %p73
    %p75 = scmp.ne.s32.totalorder %s66, %s67
    %p76 = scmp.eq.s32.totalorder %s14, 0
    %p77 = por %p75, %p76
    %p78 = scmp.ne.s32.totalorder %s66, %s67
    %p79 = scmp.eq.s32.totalorder %s15, 1
    %p80 = por %p78, %p79
    %p82 = scmp.ne.s32.totalorder %s67, %s81
    %p83 = scmp.eq.s32.totalorder %s15, 0
    %p84 = por %p82, %p83
    %s85 = ssub.s32 %s9, %s16
    %p86 = scmp.eq.s32.totalorder %s85, 0
    %s88 = sadd.s32 %s87, 1
    %s89 = scalar_select %p86, %s87, %s88
    %p92 = pneg %p86
    %p93 = scmp.eq.s32.totalorder %s9, 1
    %p94 = por %p92, %p93
    %p95 = scmp.ne.s32.totalorder %s87, %s90
    %p96 = scmp.eq.s32.totalorder %s9, 0
    %p97 = por %p95, %p96
    %p98 = scmp.ne.s32.totalorder %s87, %s90
    %p99 = scmp.eq.s32.totalorder %s14, 1
    %p100 = por %p98, %p99
    %p101 = scmp.ne.s32.totalorder %s90, %s91
    %p102 = scmp.eq.s32.totalorder %s14, 0
    %p103 = por %p101, %p102
    %p104 = scmp.ne.s32.totalorder %s90, %s91
    %p105 = scmp.eq.s32.totalorder %s15, 1
    %p106 = por %p104, %p105
    %p108 = scmp.ne.s32.totalorder %s91, %s107
    %p109 = scmp.eq.s32.totalorder %s15, 0
    %p110 = por %p108, %p109
    %p111 = scmp.le.s32.totalorder 1, %s9
    %p112 = scmp.lt.s32.totalorder %s9, 3
    %p113 = pnand %p111, %p112
    %p114 = pneg %p113
    // Predicated region
    $region9: #{ca_layer.1} parent=5 // pred_check
      _
    $region10: #{ca_layer.1} parent=5 // pred_check_branch
      %116 = sbr.rel (%p113) target = $region12
    $region11: #{ca_layer.1} parent=5 // pred_region
      %s117 = ssub.s32 %s9, 1
      // Predicated region
      $region13: #{ca_layer.1} parent=11 // pred_check
        %p118 = pneg %p56
      $region14: #{ca_layer.1} parent=11 // pred_check_branch
        %120 = sbr.rel (%p118) target = $region16
      $region15: #{ca_layer.1} parent=11 // pred_region
        _
      $region16: #{ca_layer.1} parent=11 // pred_fallthru
        _
      // Predicated region
      $region17: #{ca_layer.1} parent=11 // pred_check
        %p121 = pneg %p77
      $region18: #{ca_layer.1} parent=11 // pred_check_branch
        %123 = sbr.rel (%p121) target = $region20
      $region19: #{ca_layer.1} parent=11 // pred_region
        _
      $region20: #{ca_layer.1} parent=11 // pred_fallthru
        _
    $region12: #{ca_layer.1} parent=5 // pred_fallthru
      _
    %p124 = scmp.lt.s32.totalorder %s9, 2
    // Predicated region
    $region21: #{ca_layer.1} parent=5 // pred_check
      %p125 = pneg %p124
    $region22: #{ca_layer.1} parent=5 // pred_check_branch
      %127 = sbr.rel (%p125) target = $region24
    $region23: #{ca_layer.1} parent=5 // pred_region
      // Predicated region
      $region25: #{ca_layer.1} parent=23 // pred_check
        %p128 = pneg %p29
      $region26: #{ca_layer.1} parent=23 // pred_check_branch
        %130 = sbr.rel (%p128) target = $region28
      $region27: #{ca_layer.1} parent=23 // pred_region
        %p131 = scmp.lt.s32.totalorder %s9, 1
        %s132 = scalar_select %p131, %s9, 1
        %s133 = smul.addr %s132, 8
        %s134 = smul.addr %s133, 8
        %s135 = scalar_lea.vmem %s0, %s134
      $region28: #{ca_layer.1} parent=23 // pred_fallthru
        _
    $region24: #{ca_layer.1} parent=5 // pred_fallthru
      _
    %p136 = scmp.le.s32.totalorder 1, %s9
    %p137 = scmp.lt.s32.totalorder %s9, 3
    %p138 = pnand %p136, %p137
    %p139 = pneg %p138
    // Predicated region
    $region29: #{ca_layer.1} parent=5 // pred_check
      _
    $region30: #{ca_layer.1} parent=5 // pred_check_branch
      %141 = sbr.rel (%p138) target = $region32
    $region31: #{ca_layer.1} parent=5 // pred_region
      %s142 = ssub.s32 %s9, 1
      %p143 = scmp.lt.s32.totalorder %s14, 1
      %s144 = scalar_select %p143, %s14, 1
      %s145 = smul.addr %s144, 8
      %s146 = smul.addr %s145, 8
      %s147 = scalar_lea.vmem %s0, %s146
      %p148 = pneg %p35
      %p149 = pneg %p32
      %p150 = pneg %p56
      %p151 = pneg %p53
      %p152 = pneg %p77
      %p153 = pneg %p74
      %p154 = pneg %p103
      %p155 = pneg %p100
      %p156 = scmp.lt.s32.totalorder %s14, 1
      %s157 = scalar_select %p156, %s14, 1
      %s158 = smul.addr %s157, 8
      %s159 = smul.addr %s158, 8
      %s160 = scalar_lea.vmem %s3, %s159
      %p161 = scmp.lt.s32.totalorder %s14, 1
      %s162 = scalar_select %p161, %s14, 1
      %s163 = smul.addr %s162, 8
      %s164 = smul.addr %s163, 8
      %s165 = scalar_lea.vmem %s0, %s164
      %p166 = scmp.lt.s32.totalorder %s14, 1
      %s167 = scalar_select %p166, %s14, 1
      %s168 = smul.addr %s167, 8
      %s169 = smul.addr %s168, 8
      %s170 = scalar_lea.vmem %s3, %s169
      %v171 = vld [vmem:[%s165] sm:$0xff]
      %v172 = vld [vmem:[%s165 + $0x8] sm:$0xff]
      %v173 = vld [vmem:[%s165 + $0x10] sm:$0xff]
      %v174 = vld [vmem:[%s165 + $0x18] sm:$0xff]
      %v175 = vld [vmem:[%s165 + $0x20] sm:$0xff]
      %v176 = vld [vmem:[%s165 + $0x28] sm:$0xff]
      %v177 = vld [vmem:[%s165 + $0x30] sm:$0xff]
      %v178 = vld [vmem:[%s165 + $0x38] sm:$0xff]
      %v179 = vadd.f32 %v171, %v172
      %180 = vadd.xlane.f32.xlu0 %v179
      %v181 = vpop.xlane.xlu0 %180
      %v182 = vadd.f32 %v173, %v174
      %183 = vadd.xlane.f32.xlu0 %v182
      %v184 = vpop.xlane.xlu0 %183
      %v185 = vadd.f32 %v175, %v176
      %186 = vadd.xlane.f32.xlu0 %v185
      %v187 = vpop.xlane.xlu0 %186
      %v188 = vadd.f32 %v177, %v178
      %189 = vadd.xlane.f32.xlu0 %v188
      %v190 = vpop.xlane.xlu0 %189
      %v191 = vld [vmem:[%s1] sm:$0xff]
      %v192 = vld [vmem:[%s1 + $0x8] sm:$0xff]
      %v193 = vld [vmem:[%s1 + $0x10] sm:$0xff]
      %v194 = vld [vmem:[%s1 + $0x18] sm:$0xff]
      %v195 = vld [vmem:[%s2] sm:$0x1]
      %v200 = vlaneseq
      %v201 = vand.u32 %v200, 127
      %v202 = vlaneseq
      %v203 = vshrl.u32 %v202, 7
      %v204 = vsub.s32 %v201, %v203
      %v205 = vrot.slane %v181, %v204
      %v206 = vadd.s32 %v201, 4294967288
      %v207 = vlaneseq
      %v208 = vshrl.u32 %v207, 7
      %v209 = vsub.s32 %v206, %v208
      %v210 = vrot.slane %v184, %v209
      %vm211 = vcmask 130112
      %v212 = vsel %vm211, %v210, %v205
      %v213 = vadd.s32 %v201, 4294967280
      %v214 = vlaneseq
      %v215 = vshrl.u32 %v214, 7
      %v216 = vsub.s32 %v213, %v215
      %v217 = vrot.slane %v187, %v216
      %vm218 = vcmask 195712
      %v219 = vsel %vm218, %v217, %v212
      %v220 = vadd.s32 %v201, 4294967272
      %v221 = vlaneseq
      %v222 = vshrl.u32 %v221, 7
      %v223 = vsub.s32 %v220, %v222
      %v224 = vrot.slane %v190, %v223
      %vm225 = vcmask 261312
      %v226 = vsel %vm225, %v224, %v219
      %vm227 = vcmask 261120
      %v228 = vsel %vm227, %v226, 0
      %230 = vmatprep.subr.mxu0 0.0
      %231 = vmatpush1.msra.mxu0 %v191
      %232 = vmatprep.subr.mxu0 0.0
      %233 = vmatpush1.msra.mxu0 %v192
      %234 = vmatprep.subr.mxu0 0.0
      %235 = vmatpush1.msra.mxu0 %v193
      %236 = vmatprep.subr.mxu0 0.0
      %237 = vmatpush1.msra.mxu0 %v194
      %238 = vmatprep.subr.mxu0 0.0
      %239 = vmatpush1.msra.mxu0 0.0
      %240 = vmatprep.subr.mxu0 0.0
      %241 = vmatpush1.msra.mxu0 0.0
      %242 = vmatprep.subr.mxu0 0.0
      %243 = vmatpush1.msra.mxu0 0.0
      %244 = vmatprep.subr.mxu0 0.0
      %245 = vmatpush1.msra.mxu0 0.0
      %246 = vmatprep.subr.mxu0 0.0
      %247 = vmatpush1.msra.mxu0 0.0
      %248 = vmatprep.subr.mxu0 0.0
      %249 = vmatpush1.msra.mxu0 0.0
      %250 = vmatprep.subr.mxu0 0.0
      %251 = vmatpush1.msra.mxu0 0.0
      %252 = vmatprep.subr.mxu0 0.0
      %253 = vmatpush1.msra.mxu0 0.0
      %254 = vmatprep.subr.mxu0 0.0
      %255 = vmatpush1.msra.mxu0 0.0
      %256 = vmatprep.subr.mxu0 0.0
      %257 = vmatpush1.msra.mxu0 0.0
      %258 = vmatprep.subr.mxu0 0.0
      %259 = vmatpush1.msra.mxu0 0.0
      %260 = vmatprep.subr.mxu0 0.0
      %261 = vmatpush1.msra.mxu0 0.0
      %262 = vmatprep.subr.mxu0 0.0
      %263 = vmatpush1.msra.mxu0 0.0
      %264 = vmatprep.subr.mxu0 0.0
      %265 = vmatpush1.msra.mxu0 0.0
      %266 = vmatprep.subr.mxu0 0.0
      %267 = vmatpush1.msra.mxu0 0.0
      %268 = vmatprep.subr.mxu0 0.0
      %269 = vmatpush1.msra.mxu0 0.0
      %270 = vmatprep.subr.mxu0 0.0
      %271 = vmatpush1.msra.mxu0 0.0
      %272 = vmatprep.subr.mxu0 0.0
      %273 = vmatpush1.msra.mxu0 0.0
      %274 = vmatprep.subr.mxu0 0.0
      %275 = vmatpush1.msra.mxu0 0.0
      %276 = vmatprep.subr.mxu0 0.0
      %277 = vmatpush1.msra.mxu0 0.0
      %278 = vmatprep.subr.mxu0 0.0
      %279 = vmatpush1.msra.mxu0 0.0
      %280 = vmatprep.subr.mxu0 0.0
      %281 = vmatpush1.msra.mxu0 0.0
      %282 = vmatprep.subr.mxu0 0.0
      %283 = vmatpush1.msra.mxu0 0.0
      %284 = vmatprep.subr.mxu0 0.0
      %285 = vmatpush1.msra.mxu0 0.0
      %286 = vmatprep.subr.mxu0 0.0
      %287 = vmatpush1.msra.mxu0 0.0
      %288 = vmatprep.subr.mxu0 0.0
      %289 = vmatpush1.msra.mxu0 0.0
      %290 = vmatprep.subr.mxu0 0.0
      %291 = vmatpush1.msra.mxu0 0.0
      %292 = vmatprep.subr.mxu0 0.0
      %293 = vmatpush1.msra.mxu0 0.0
      %294 = vmatprep.mubr.f32.mxu0 0.0
      %295 = vmatmul.mubr.f32.gmra.mrb[0].mxu0 %v228
      %v296 = vpop.f32.mrb[0].mxu0
      %v297 = vadd.f32 %v195, %v296
      %v298 = vpop.f32.mrb[0].mxu0
      %299 = vdwg.mxu0
      %v300 = vxor.u32 %v297, 2147483648
      %v301 = vmul.f32 %v300, 1.442695
      %v302 = vpow.pop %v301
      %v303 = vadd.f32 %v302, 1.0
      %v304 = vrcp.pop %v303
      %v305 = vmul.f32 1.0, %v304
      %v306 = vlaneseq
      %v307 = vshrl.u32 %v306, 7
      %v308 = vsub.s32 0, %v307
      %v309 = vrot.slane %v305, %v308
      %311 = vbcast.lane.b32.xlu0 %v309, 256
      %v312 = vpop.permute.xlu0 %311
      %s314 = sor.u32 256, 8
      %315 = vbcast.lane.b32.xlu0 %v309, %s314
      %v316 = vpop.permute.xlu0 %315
      %s318 = sor.u32 256, 16
      %319 = vbcast.lane.b32.xlu0 %v309, %s318
      %v320 = vpop.permute.xlu0 %319
      %s322 = sor.u32 256, 24
      %323 = vbcast.lane.b32.xlu0 %v309, %s322
      %v324 = vpop.permute.xlu0 %323
      %v325 = vmul.f32 %v171, %v312
      %v326 = vmul.f32 %v172, %v312
      %v327 = vmul.f32 %v173, %v316
      %v328 = vmul.f32 %v174, %v316
      %v329 = vmul.f32 %v175, %v320
      %v330 = vmul.f32 %v176, %v320
      %v331 = vmul.f32 %v177, %v324
      %v332 = vmul.f32 %v178, %v324
      %333 = vst [vmem:[%s170] sm:$0xff] %v325
      %334 = vst [vmem:[%s170 + $0x8] sm:$0xff] %v326
      %335 = vst [vmem:[%s170 + $0x10] sm:$0xff] %v327
      %336 = vst [vmem:[%s170 + $0x18] sm:$0xff] %v328
      %337 = vst [vmem:[%s170 + $0x20] sm:$0xff] %v329
      %338 = vst [vmem:[%s170 + $0x28] sm:$0xff] %v330
      %339 = vst [vmem:[%s170 + $0x30] sm:$0xff] %v331
      %340 = vst [vmem:[%s170 + $0x38] sm:$0xff] %v332
      %p341 = scmp.lt.s32.totalorder %s14, 1
      %s342 = scalar_select %p341, %s14, 1
      %s343 = smul.addr %s342, 8
      %s344 = smul.addr %s343, 8
      %s345 = scalar_lea.vmem %s3, %s344
      // Predicated region
      $region33: #{ca_layer.1} parent=31 // pred_check
        %p346 = pneg %p100
      $region34: #{ca_layer.1} parent=31 // pred_check_branch
        %348 = sbr.rel (%p346) target = $region36
      $region35: #{ca_layer.1} parent=31 // pred_region
        _
      $region36: #{ca_layer.1} parent=31 // pred_fallthru
        _
    $region32: #{ca_layer.1} parent=5 // pred_fallthru
      _
    %p349 = scmp.le.s32.totalorder 2, %s9
    // Predicated region
    $region37: #{ca_layer.1} parent=5 // pred_check
      %p350 = pneg %p349
    $region38: #{ca_layer.1} parent=5 // pred_check_branch
      %352 = sbr.rel (%p350) target = $region40
    $region39: #{ca_layer.1} parent=5 // pred_region
      %s353 = ssub.s32 %s9, 2
      // Predicated region
      $region41: #{ca_layer.1} parent=39 // pred_check
        %p354 = pneg %p106
      $region42: #{ca_layer.1} parent=39 // pred_check_branch
        %356 = sbr.rel (%p354) target = $region44
      $region43: #{ca_layer.1} parent=39 // pred_region
        %p357 = scmp.lt.s32.totalorder %s15, 1
        %s358 = scalar_select %p357, %s15, 1
        %s359 = smul.addr %s358, 8
        %s360 = smul.addr %s359, 8
        %s361 = scalar_lea.vmem %s3, %s360
      $region44: #{ca_layer.1} parent=39 // pred_fallthru
        _
    $region40: #{ca_layer.1} parent=5 // pred_fallthru
      _
  $region6: #{ca_layer.1} parent=0 // loop_footer
    %s13 = sadd.s32 1, %s9
  $region7: #{ca_layer.1} parent=0 // loop_footer_branch
    %8 = sbr.rel target = $region3
  $region8: #{ca_layer.1} parent=0 // loop_exit
    _

</llo_original>
